<compile_context>
chip_gen: v5e
topology: v5e:2x2
jax: 0.10.0
libtpu: 0.0.40
codegen_flags: <defaults>
</compile_context>

<pallas_src>
import functools
import math

import numpy as np
import jax
import jax.numpy as jnp
from jax import lax
from jax.experimental import pallas as pl
from jax.experimental.pallas import tpu as pltpu

WINDOW_SIZE = 11
SIGMA = 1.5
C1 = 0.01 ** 2
C2 = 0.03 ** 2


def _gaussian_1d(window_size: int, sigma: float) -> np.ndarray:
    g = np.array(
        [math.exp(-((x - window_size // 2) ** 2) / float(2 * sigma ** 2))
         for x in range(window_size)],
        dtype=np.float32,
    )
    return (g / g.sum()).astype(np.float32)


def _conv_matrix(n: int, window_size: int, sigma: float) -> np.ndarray:
    """(n, n) band matrix M with M[i, j] = g[j - i + pad]; M @ x == 'same' 1D conv."""
    g = _gaussian_1d(window_size, sigma)
    pad = window_size // 2
    idx = np.arange(n)
    k = idx[None, :] - idx[:, None] + pad
    m = np.where((k >= 0) & (k < window_size),
                 g[np.clip(k, 0, window_size - 1)], np.float32(0.0))
    return m.astype(np.float32)


def _round_up(x: int, m: int) -> int:
    return ((x + m - 1) // m) * m


def _pick_batch_tile(n: int, hp: int, wp: int, max_tb: int = 8,
                     budget_bytes: int = 40 << 20) -> int:
    """Batch tile: fits a VMEM budget, divides N, and (if possible) gives >=2 steps."""
    per_tb = 128 * hp * wp                       # ~32 live f32 images per unit of tile
    tb = max(1, min(max_tb, n, budget_bytes // max(per_tb, 1)))
    while n % tb:
        tb -= 1
    if n // tb < 2 and tb > 1:                   # >=2 grid steps -> v7x megacore + prefetch
        tb = max(1, tb // 2)
        while n % tb:
            tb -= 1
    return tb


def _const_block_spec(shape):
    """BlockSpec for a grid-constant operand; single-buffer it to save VMEM."""
    index_map = lambda b: (0,) * len(shape)
    try:
        return pl.BlockSpec(shape, index_map, pipeline_mode=pl.Buffered(1))
    except Exception:  # pragma: no cover - older JAX without pipeline_mode
        return pl.BlockSpec(shape, index_map)


def _ssim_kernel(bgp_ref, bgn_ref, gt_ref, mwt_ref, mh_ref, out_ref, *,
                 h_valid, w_valid):
    x1p = bgp_ref[...][:, 0].astype(jnp.float32)        # (tb, Hp, Wp)
    x1n = bgn_ref[...][:, 0].astype(jnp.float32)        # (tb, Hp, Wp)
    gt = gt_ref[...].astype(jnp.float32)                # (tb, 2, 1, Hp, Wp)
    x2p = gt[:, 0, 0]                                   # pairs with bg_prev
    x2n = gt[:, 1, 0]                                   # pairs with bg_now

    tb, hp, wp = x1p.shape
    n_img = 2 * tb

    mwt = mwt_ref[...]        # (Wp, Wp): right-multiply == 'same' conv along W
    mh = mh_ref[...]          # (Hp, Hp): left-multiply  == 'same' conv along H

    x1 = jnp.concatenate([x1p, x1n], axis=0)             # (n_img, Hp, Wp)
    x2 = jnp.concatenate([x2p, x2n], axis=0)             # (n_img, Hp, Wp)

    def conv2d_group(v):
        # v: (n_img, Hp, Wp).  W-direction conv: one (n_img*Hp, Wp)@(Wp,Wp)
        # matmul (reshape is free since Hp % 8 == 0).
        yw = jnp.dot(v.reshape(n_img * hp, wp), mwt,
                     preferred_element_type=jnp.float32).reshape(n_img, hp, wp)
        # Lay the images side by side along lanes (Wp is a multiple of 128, so
        # the concat is lane-aligned), then the H-direction conv for the whole
        # group is ONE weight-stationary (Hp,Hp)@(Hp, n_img*Wp) matmul.
        yl = jnp.concatenate([yw[k] for k in range(n_img)], axis=1)
        return jnp.dot(mh, yl, preferred_element_type=jnp.float32)  # (Hp, n_img*Wp)

    mu1 = conv2d_group(x1)
    mu2 = conv2d_group(x2)
    e11 = conv2d_group(x1 * x1)
    e22 = conv2d_group(x2 * x2)
    e12 = conv2d_group(x1 * x2)

    mu1_sq = mu1 * mu1
    mu2_sq = mu2 * mu2
    mu1_mu2 = mu1 * mu2
    sigma1_sq = e11 - mu1_sq
    sigma2_sq = e22 - mu2_sq
    sigma12 = e12 - mu1_mu2

    num = (2.0 * mu1_mu2 + C1) * (2.0 * sigma12 + C2)
    den = (mu1_sq + mu2_sq + C1) * (sigma1_sq + sigma2_sq + C2)
    # den >= C1*C2 > 0, so the fast EUP reciprocal cannot divide by zero.
    ssim_map = num * pl.reciprocal(den, approx=True)      # (Hp, n_img*Wp)

    # Mask out rows/cols that only exist because of the alignment padding.
    if h_valid != hp or w_valid != wp:
        row_ok = lax.broadcasted_iota(jnp.int32, (hp, wp), 0) < h_valid
        col_ok = lax.broadcasted_iota(jnp.int32, (hp, wp), 1) < w_valid
        valid = jnp.tile(row_ok & col_ok, (1, n_img))      # (Hp, n_img*Wp)
        ssim_map = jnp.where(valid, ssim_map, 0.0)

    # Per-image sums over the valid (H, W) region.
    col_sums = jnp.sum(ssim_map, axis=0, keepdims=True)               # (1, n_img*Wp)
    per_img = jnp.sum(col_sums.reshape(n_img, wp), axis=-1,
                      keepdims=True)                                   # (n_img, 1)
    out_ref[...] = per_img.reshape(1, 1, n_img)


def ssim_forward(bg_prev, bg_now, gt, window_size=WINDOW_SIZE, sigma=SIGMA,
                 max_batch_tile=8):
    """Equivalent of SSIM.forward (size_average=True): returns a scalar."""
    N, C, H, W = bg_prev.shape
    assert C == 1, "module is constructed with channel=1"
    assert bg_now.shape == (N, 1, H, W)
    assert gt.shape == (N, 2, 1, H, W)

    # MXU / vreg alignment padding.  Zero padding is exactly the conv's 'same'
    # zero padding; padded pixels are masked out of the in-kernel sums.
    hp, wp = _round_up(H, 8), _round_up(W, 128)
    if (hp, wp) != (H, W):
        sp4 = ((0, 0), (0, 0), (0, hp - H), (0, wp - W))
        bg_prev = jnp.pad(bg_prev, sp4)
        bg_now = jnp.pad(bg_now, sp4)
        gt = jnp.pad(gt, ((0, 0), (0, 0), (0, 0), (0, hp - H), (0, wp - W)))

    tb = _pick_batch_tile(N, hp, wp, max_tb=max_batch_tile)
    n_blocks = N // tb
    n_img = 2 * tb

    mwt = jnp.asarray(_conv_matrix(wp, window_size, sigma).T)   # (Wp, Wp)
    mh = jnp.asarray(_conv_matrix(hp, window_size, sigma))      # (Hp, Hp)

    # Per-step VMEM estimate (double-buffered inputs + conv operands/results
    # + epilogue temporaries) -> explicit scoped-VMEM limit.
    est = 128 * tb * hp * wp + 8 * (hp * hp + wp * wp) + (4 << 20)
    vmem_limit = int(min(100 << 20, max(32 << 20, est)))

    kernel = functools.partial(_ssim_kernel, h_valid=H, w_valid=W)

    sums = pl.pallas_call(
        kernel,
        out_shape=jax.ShapeDtypeStruct((n_blocks, 1, n_img), jnp.float32),
        grid=(n_blocks,),
        in_specs=[
            pl.BlockSpec((tb, 1, hp, wp), lambda b: (b, 0, 0, 0)),
            pl.BlockSpec((tb, 1, hp, wp), lambda b: (b, 0, 0, 0)),
            pl.BlockSpec((tb, 2, 1, hp, wp), lambda b: (b, 0, 0, 0, 0)),
            _const_block_spec((wp, wp)),
            _const_block_spec((hp, hp)),
        ],
        out_specs=pl.BlockSpec((1, 1, n_img), lambda b: (b, 0, 0)),
        compiler_params=pltpu.CompilerParams(
            dimension_semantics=("parallel",),
            vmem_limit_bytes=vmem_limit),
    )(bg_prev, bg_now, gt, mwt, mh)

    sums = sums.reshape(n_blocks, 2, tb)      # [:, 0]: prev pairs, [:, 1]: now pairs
    denom = jnp.float32(N * 1 * H * W)        # mean over (N, channel=1, H, W)
    ssim_prev = jnp.sum(sums[:, 0, :]) / denom
    ssim_now = jnp.sum(sums[:, 1, :]) / denom
    return ssim_prev + ssim_now


if __name__ == "__main__":
    key = jax.random.PRNGKey(0)
    k1, k2, k3 = jax.random.split(key, 3)

    N, H, W = 2, 16, 16
    bg_prev = jax.random.uniform(k1, (N, 1, H, W), dtype=jnp.float32)
    bg_now = jax.random.uniform(k2, (N, 1, H, W), dtype=jnp.float32)
    gt = jax.random.uniform(k3, (N, 2, 1, H, W), dtype=jnp.float32)

    out = jax.jit(ssim_forward)(bg_prev, bg_now, gt)
    out = jax.block_until_ready(out)
    assert out.shape == () and bool(jnp.isfinite(out))
    print("KERNEL_OK")
</pallas_src>

<mosaic_0001>
module attributes {stable_mosaic.version = 11 : i64} {
  func.func @_ssim_kernel(%arg0: i32, %arg1: memref<1x1x16x128xf32, #tpu.memory_space<vmem>>, %arg2: memref<1x1x16x128xf32, #tpu.memory_space<vmem>>, %arg3: memref<1x2x1x16x128xf32, #tpu.memory_space<vmem>>, %arg4: memref<128x128xf32, #tpu.memory_space<vmem>>, %arg5: memref<16x16xf32, #tpu.memory_space<vmem>>, %arg6: memref<1x1x2xf32, #tpu.memory_space<vmem>>) attributes {dimension_semantics = [#tpu.dimension_semantics<parallel>], iteration_bounds = array<i64: 2>, scalar_prefetch = 0 : i64, scratch_operands = 0 : i64, tpu.core_type = #tpu.core_type<tc>, window_params = [{transform_indices = @transform_0, window_bounds = array<i64: 1, 1, 16, 128>}, {transform_indices = @transform_1, window_bounds = array<i64: 1, 1, 16, 128>}, {transform_indices = @transform_2, window_bounds = array<i64: 1, 2, 1, 16, 128>}, {pipeline_mode = #tpu.pipeline_mode<synchronous>, transform_indices = @transform_3, window_bounds = array<i64: 128, 128>}, {pipeline_mode = #tpu.pipeline_mode<synchronous>, transform_indices = @transform_4, window_bounds = array<i64: 16, 16>}, {transform_indices = @transform_5, window_bounds = array<i64: 1, 1, 2>}]} {
    %c0 = arith.constant 0 : index
    %c0_0 = arith.constant 0 : index
    %c0_1 = arith.constant 0 : index
    %c0_2 = arith.constant 0 : index
    %0 = vector.load %arg1[%c0, %c0_0, %c0_1, %c0_2] : memref<1x1x16x128xf32, #tpu.memory_space<vmem>>, vector<1x1x16x128xf32>
    %1 = vector.shape_cast %0 : vector<1x1x16x128xf32> to vector<1x16x128xf32>
    %c0_3 = arith.constant 0 : index
    %c0_4 = arith.constant 0 : index
    %c0_5 = arith.constant 0 : index
    %c0_6 = arith.constant 0 : index
    %2 = vector.load %arg2[%c0_3, %c0_4, %c0_5, %c0_6] : memref<1x1x16x128xf32, #tpu.memory_space<vmem>>, vector<1x1x16x128xf32>
    %3 = vector.shape_cast %2 : vector<1x1x16x128xf32> to vector<1x16x128xf32>
    %c0_7 = arith.constant 0 : index
    %c0_8 = arith.constant 0 : index
    %c0_9 = arith.constant 0 : index
    %c0_10 = arith.constant 0 : index
    %c0_11 = arith.constant 0 : index
    %4 = vector.load %arg3[%c0_7, %c0_8, %c0_9, %c0_10, %c0_11] : memref<1x2x1x16x128xf32, #tpu.memory_space<vmem>>, vector<1x2x1x16x128xf32>
    %5 = vector.extract_strided_slice %4 {offsets = [0, 0, 0, 0, 0], sizes = [1, 1, 1, 16, 128], strides = [1, 1, 1, 1, 1]} : vector<1x2x1x16x128xf32> to vector<1x1x1x16x128xf32>
    %6 = vector.shape_cast %5 : vector<1x1x1x16x128xf32> to vector<1x16x128xf32>
    %7 = vector.extract_strided_slice %4 {offsets = [0, 1, 0, 0, 0], sizes = [1, 1, 1, 16, 128], strides = [1, 1, 1, 1, 1]} : vector<1x2x1x16x128xf32> to vector<1x1x1x16x128xf32>
    %8 = vector.shape_cast %7 : vector<1x1x1x16x128xf32> to vector<1x16x128xf32>
    %c0_12 = arith.constant 0 : index
    %c0_13 = arith.constant 0 : index
    %9 = vector.load %arg4[%c0_12, %c0_13] : memref<128x128xf32, #tpu.memory_space<vmem>>, vector<128x128xf32>
    %c0_14 = arith.constant 0 : index
    %c0_15 = arith.constant 0 : index
    %10 = vector.load %arg5[%c0_14, %c0_15] : memref<16x16xf32, #tpu.memory_space<vmem>>, vector<16x16xf32>
    %11 = tpu.concatenate %1, %3 in 0 : vector<1x16x128xf32>, vector<1x16x128xf32> -> vector<2x16x128xf32>
    %12 = tpu.concatenate %6, %8 in 0 : vector<1x16x128xf32>, vector<1x16x128xf32> -> vector<2x16x128xf32>
    %13 = vector.shape_cast %11 : vector<2x16x128xf32> to vector<32x128xf32>
    %cst = arith.constant dense<0.000000e+00> : vector<32x128xf32>
    %14 = tpu.matmul %13, %9, %cst {dimension_numbers = #tpu.dot_dimension_numbers<[1], [0], [0], [1], [0, 0, 1, 1], [], []>} : vector<32x128xf32>, vector<128x128xf32>, vector<32x128xf32> -> vector<32x128xf32>
    %15 = vector.shape_cast %14 : vector<32x128xf32> to vector<2x16x128xf32>
    %16 = vector.extract_strided_slice %15 {offsets = [0, 0, 0], sizes = [1, 16, 128], strides = [1, 1, 1]} : vector<2x16x128xf32> to vector<1x16x128xf32>
    %17 = vector.shape_cast %16 : vector<1x16x128xf32> to vector<16x128xf32>
    %18 = vector.extract_strided_slice %15 {offsets = [1, 0, 0], sizes = [1, 16, 128], strides = [1, 1, 1]} : vector<2x16x128xf32> to vector<1x16x128xf32>
    %19 = vector.shape_cast %18 : vector<1x16x128xf32> to vector<16x128xf32>
    %20 = tpu.concatenate %17, %19 in 1 : vector<16x128xf32>, vector<16x128xf32> -> vector<16x256xf32>
    %cst_16 = arith.constant dense<0.000000e+00> : vector<16x256xf32>
    %21 = tpu.matmul %10, %20, %cst_16 {dimension_numbers = #tpu.dot_dimension_numbers<[1], [0], [0], [1], [0, 0, 1, 1], [], []>} : vector<16x16xf32>, vector<16x256xf32>, vector<16x256xf32> -> vector<16x256xf32>
    %22 = vector.shape_cast %12 : vector<2x16x128xf32> to vector<32x128xf32>
    %cst_17 = arith.constant dense<0.000000e+00> : vector<32x128xf32>
    %23 = tpu.matmul %22, %9, %cst_17 {dimension_numbers = #tpu.dot_dimension_numbers<[1], [0], [0], [1], [0, 0, 1, 1], [], []>} : vector<32x128xf32>, vector<128x128xf32>, vector<32x128xf32> -> vector<32x128xf32>
    %24 = vector.shape_cast %23 : vector<32x128xf32> to vector<2x16x128xf32>
    %25 = vector.extract_strided_slice %24 {offsets = [0, 0, 0], sizes = [1, 16, 128], strides = [1, 1, 1]} : vector<2x16x128xf32> to vector<1x16x128xf32>
    %26 = vector.shape_cast %25 : vector<1x16x128xf32> to vector<16x128xf32>
    %27 = vector.extract_strided_slice %24 {offsets = [1, 0, 0], sizes = [1, 16, 128], strides = [1, 1, 1]} : vector<2x16x128xf32> to vector<1x16x128xf32>
    %28 = vector.shape_cast %27 : vector<1x16x128xf32> to vector<16x128xf32>
    %29 = tpu.concatenate %26, %28 in 1 : vector<16x128xf32>, vector<16x128xf32> -> vector<16x256xf32>
    %cst_18 = arith.constant dense<0.000000e+00> : vector<16x256xf32>
    %30 = tpu.matmul %10, %29, %cst_18 {dimension_numbers = #tpu.dot_dimension_numbers<[1], [0], [0], [1], [0, 0, 1, 1], [], []>} : vector<16x16xf32>, vector<16x256xf32>, vector<16x256xf32> -> vector<16x256xf32>
    %31 = arith.mulf %11, %11 : vector<2x16x128xf32>
    %32 = vector.shape_cast %31 : vector<2x16x128xf32> to vector<32x128xf32>
    %cst_19 = arith.constant dense<0.000000e+00> : vector<32x128xf32>
    %33 = tpu.matmul %32, %9, %cst_19 {dimension_numbers = #tpu.dot_dimension_numbers<[1], [0], [0], [1], [0, 0, 1, 1], [], []>} : vector<32x128xf32>, vector<128x128xf32>, vector<32x128xf32> -> vector<32x128xf32>
    %34 = vector.shape_cast %33 : vector<32x128xf32> to vector<2x16x128xf32>
    %35 = vector.extract_strided_slice %34 {offsets = [0, 0, 0], sizes = [1, 16, 128], strides = [1, 1, 1]} : vector<2x16x128xf32> to vector<1x16x128xf32>
    %36 = vector.shape_cast %35 : vector<1x16x128xf32> to vector<16x128xf32>
    %37 = vector.extract_strided_slice %34 {offsets = [1, 0, 0], sizes = [1, 16, 128], strides = [1, 1, 1]} : vector<2x16x128xf32> to vector<1x16x128xf32>
    %38 = vector.shape_cast %37 : vector<1x16x128xf32> to vector<16x128xf32>
    %39 = tpu.concatenate %36, %38 in 1 : vector<16x128xf32>, vector<16x128xf32> -> vector<16x256xf32>
    %cst_20 = arith.constant dense<0.000000e+00> : vector<16x256xf32>
    %40 = tpu.matmul %10, %39, %cst_20 {dimension_numbers = #tpu.dot_dimension_numbers<[1], [0], [0], [1], [0, 0, 1, 1], [], []>} : vector<16x16xf32>, vector<16x256xf32>, vector<16x256xf32> -> vector<16x256xf32>
    %41 = arith.mulf %12, %12 : vector<2x16x128xf32>
    %42 = vector.shape_cast %41 : vector<2x16x128xf32> to vector<32x128xf32>
    %cst_21 = arith.constant dense<0.000000e+00> : vector<32x128xf32>
    %43 = tpu.matmul %42, %9, %cst_21 {dimension_numbers = #tpu.dot_dimension_numbers<[1], [0], [0], [1], [0, 0, 1, 1], [], []>} : vector<32x128xf32>, vector<128x128xf32>, vector<32x128xf32> -> vector<32x128xf32>
    %44 = vector.shape_cast %43 : vector<32x128xf32> to vector<2x16x128xf32>
    %45 = vector.extract_strided_slice %44 {offsets = [0, 0, 0], sizes = [1, 16, 128], strides = [1, 1, 1]} : vector<2x16x128xf32> to vector<1x16x128xf32>
    %46 = vector.shape_cast %45 : vector<1x16x128xf32> to vector<16x128xf32>
    %47 = vector.extract_strided_slice %44 {offsets = [1, 0, 0], sizes = [1, 16, 128], strides = [1, 1, 1]} : vector<2x16x128xf32> to vector<1x16x128xf32>
    %48 = vector.shape_cast %47 : vector<1x16x128xf32> to vector<16x128xf32>
    %49 = tpu.concatenate %46, %48 in 1 : vector<16x128xf32>, vector<16x128xf32> -> vector<16x256xf32>
    %cst_22 = arith.constant dense<0.000000e+00> : vector<16x256xf32>
    %50 = tpu.matmul %10, %49, %cst_22 {dimension_numbers = #tpu.dot_dimension_numbers<[1], [0], [0], [1], [0, 0, 1, 1], [], []>} : vector<16x16xf32>, vector<16x256xf32>, vector<16x256xf32> -> vector<16x256xf32>
    %51 = arith.mulf %11, %12 : vector<2x16x128xf32>
    %52 = vector.shape_cast %51 : vector<2x16x128xf32> to vector<32x128xf32>
    %cst_23 = arith.constant dense<0.000000e+00> : vector<32x128xf32>
    %53 = tpu.matmul %52, %9, %cst_23 {dimension_numbers = #tpu.dot_dimension_numbers<[1], [0], [0], [1], [0, 0, 1, 1], [], []>} : vector<32x128xf32>, vector<128x128xf32>, vector<32x128xf32> -> vector<32x128xf32>
    %54 = vector.shape_cast %53 : vector<32x128xf32> to vector<2x16x128xf32>
    %55 = vector.extract_strided_slice %54 {offsets = [0, 0, 0], sizes = [1, 16, 128], strides = [1, 1, 1]} : vector<2x16x128xf32> to vector<1x16x128xf32>
    %56 = vector.shape_cast %55 : vector<1x16x128xf32> to vector<16x128xf32>
    %57 = vector.extract_strided_slice %54 {offsets = [1, 0, 0], sizes = [1, 16, 128], strides = [1, 1, 1]} : vector<2x16x128xf32> to vector<1x16x128xf32>
    %58 = vector.shape_cast %57 : vector<1x16x128xf32> to vector<16x128xf32>
    %59 = tpu.concatenate %56, %58 in 1 : vector<16x128xf32>, vector<16x128xf32> -> vector<16x256xf32>
    %cst_24 = arith.constant dense<0.000000e+00> : vector<16x256xf32>
    %60 = tpu.matmul %10, %59, %cst_24 {dimension_numbers = #tpu.dot_dimension_numbers<[1], [0], [0], [1], [0, 0, 1, 1], [], []>} : vector<16x16xf32>, vector<16x256xf32>, vector<16x256xf32> -> vector<16x256xf32>
    %61 = arith.mulf %21, %21 : vector<16x256xf32>
    %62 = arith.mulf %30, %30 : vector<16x256xf32>
    %63 = arith.mulf %21, %30 : vector<16x256xf32>
    %64 = arith.subf %40, %61 : vector<16x256xf32>
    %65 = arith.subf %50, %62 : vector<16x256xf32>
    %66 = arith.subf %60, %63 : vector<16x256xf32>
    %cst_25 = arith.constant 2.000000e+00 : f32
    %67 = vector.broadcast %cst_25 : f32 to vector<16x256xf32>
    %68 = arith.mulf %67, %63 : vector<16x256xf32>
    %cst_26 = arith.constant 9.99999974E-5 : f32
    %69 = vector.broadcast %cst_26 : f32 to vector<16x256xf32>
    %70 = arith.addf %68, %69 : vector<16x256xf32>
    %cst_27 = arith.constant 2.000000e+00 : f32
    %71 = vector.broadcast %cst_27 : f32 to vector<16x256xf32>
    %72 = arith.mulf %71, %66 : vector<16x256xf32>
    %cst_28 = arith.constant 8.99999984E-4 : f32
    %73 = vector.broadcast %cst_28 : f32 to vector<16x256xf32>
    %74 = arith.addf %72, %73 : vector<16x256xf32>
    %75 = arith.mulf %70, %74 : vector<16x256xf32>
    %76 = arith.addf %61, %62 : vector<16x256xf32>
    %cst_29 = arith.constant 9.99999974E-5 : f32
    %77 = vector.broadcast %cst_29 : f32 to vector<16x256xf32>
    %78 = arith.addf %76, %77 : vector<16x256xf32>
    %79 = arith.addf %64, %65 : vector<16x256xf32>
    %cst_30 = arith.constant 8.99999984E-4 : f32
    %80 = vector.broadcast %cst_30 : f32 to vector<16x256xf32>
    %81 = arith.addf %79, %80 : vector<16x256xf32>
    %82 = arith.mulf %78, %81 : vector<16x256xf32>
    %83 = tpu.reciprocal %82 {approx = true} : vector<16x256xf32> -> vector<16x256xf32>
    %84 = arith.mulf %75, %83 : vector<16x256xf32>
    %85 = tpu.iota {dimensions = array<i32: 0>} : vector<16x128xi32>
    %c16_i32 = arith.constant 16 : i32
    %86 = vector.broadcast %c16_i32 : i32 to vector<16x128xi32>
    %87 = arith.cmpi slt, %85, %86 : vector<16x128xi32>
    %88 = tpu.iota {dimensions = array<i32: 1>} : vector<16x128xi32>
    %c16_i32_31 = arith.constant 16 : i32
    %89 = vector.broadcast %c16_i32_31 : i32 to vector<16x128xi32>
    %90 = arith.cmpi slt, %88, %89 : vector<16x128xi32>
    %91 = arith.andi %87, %90 : vector<16x128xi1>
    %92 = tpu.concatenate %91, %91 in 1 : vector<16x128xi1>, vector<16x128xi1> -> vector<16x256xi1>
    %cst_32 = arith.constant 0.000000e+00 : f32
    %93 = vector.broadcast %cst_32 : f32 to vector<16x256xf32>
    %94 = arith.select %92, %84, %93 : vector<16x256xi1>, vector<16x256xf32>
    %cst_33 = arith.constant dense<0.000000e+00> : vector<256xf32>
    %95 = vector.multi_reduction <add>, %94, %cst_33 [0] : vector<16x256xf32> to vector<256xf32>
    %96 = vector.shape_cast %95 : vector<256xf32> to vector<1x256xf32>
    %97 = vector.shape_cast %96 : vector<1x256xf32> to vector<2x128xf32>
    %cst_34 = arith.constant dense<0.000000e+00> : vector<2xf32>
    %98 = vector.multi_reduction <add>, %97, %cst_34 [1] : vector<2x128xf32> to vector<2xf32>
    %99 = vector.shape_cast %98 : vector<2xf32> to vector<2x1xf32>
    %100 = vector.shape_cast %99 : vector<2x1xf32> to vector<1x1x2xf32>
    %c0_35 = arith.constant 0 : index
    %c0_36 = arith.constant 0 : index
    %c0_37 = arith.constant 0 : index
    %101 = vector.load %arg6[%c0_35, %c0_36, %c0_37] : memref<1x1x2xf32, #tpu.memory_space<vmem>>, vector<1x1x2xf32>
    tpu.vector_store %arg6[%c0_35, %c0_36, %c0_37], %100 {strides = array<i32>} : memref<1x1x2xf32, #tpu.memory_space<vmem>>, vector<1x1x2xf32>,
    return
  }
  func.func @transform_0(%arg0: i32) -> (i32, i32, i32, i32) {
    %c0_i32 = arith.constant 0 : i32
    %c0_i32_0 = arith.constant 0 : i32
    %c0_i32_1 = arith.constant 0 : i32
    %c0_i32_2 = arith.constant 0 : i32
    return %arg0, %c0_i32, %c0_i32_0, %c0_i32_1 : i32, i32, i32, i32
  }
  func.func @transform_1(%arg0: i32) -> (i32, i32, i32, i32) {
    %c0_i32 = arith.constant 0 : i32
    %c0_i32_0 = arith.constant 0 : i32
    %c0_i32_1 = arith.constant 0 : i32
    %c0_i32_2 = arith.constant 0 : i32
    return %arg0, %c0_i32, %c0_i32_0, %c0_i32_1 : i32, i32, i32, i32
  }
  func.func @transform_2(%arg0: i32) -> (i32, i32, i32, i32, i32) {
    %c0_i32 = arith.constant 0 : i32
    %c0_i32_0 = arith.constant 0 : i32
    %c0_i32_1 = arith.constant 0 : i32
    %c0_i32_2 = arith.constant 0 : i32
    %c0_i32_3 = arith.constant 0 : i32
    return %arg0, %c0_i32, %c0_i32_0, %c0_i32_1, %c0_i32_2 : i32, i32, i32, i32, i32
  }
  func.func @transform_3(%arg0: i32) -> (i32, i32) {
    %c0_i32 = arith.constant 0 : i32
    %c0_i32_0 = arith.constant 0 : i32
    %c0_i32_1 = arith.constant 0 : i32
    return %c0_i32, %c0_i32_0 : i32, i32
  }
  func.func @transform_4(%arg0: i32) -> (i32, i32) {
    %c0_i32 = arith.constant 0 : i32
    %c0_i32_0 = arith.constant 0 : i32
    %c0_i32_1 = arith.constant 0 : i32
    return %c0_i32, %c0_i32_0 : i32, i32
  }
  func.func @transform_5(%arg0: i32) -> (i32, i32, i32) {
    %c0_i32 = arith.constant 0 : i32
    %c0_i32_0 = arith.constant 0 : i32
    %c0_i32_1 = arith.constant 0 : i32
    return %arg0, %c0_i32, %c0_i32_0 : i32, i32, i32
  }
}

</mosaic_0001>

<llo_original>
// kernel: ssim_forward.1
$region0: #{ssim_forward.1}
  #allocation0 [shape = 'u32[]', space=smem, size = 0x4, offset = 0x4, fixed_abs, tag = 'smem constant byte address 0x4 - core index']
  #allocation1 [shape = 'u32[72,128]{1,0:T(1,128)}', space=vmem, size = 0x9000, scoped, tag = 'internal scratch']
  %s0 = inlined_call_operand.vmem [shape: f32[2,1,16,128], index: 0, kind: input, shape index: {}]
  %s1 = inlined_call_operand.vmem [shape: f32[2,1,16,128], index: 1, kind: input, shape index: {}]
  %s2 = inlined_call_operand.vmem [shape: f32[2,2,1,16,128], index: 2, kind: input, shape index: {}]
  %s3 = inlined_call_operand.vmem [shape: f32[128,128], index: 3, kind: input, shape index: {}]
  %s4 = inlined_call_operand.vmem [shape: f32[16,16], index: 4, kind: input, shape index: {}]
  %s5 = inlined_call_operand.vmem [shape: f32[2,1,2], index: 5, kind: output, shape index: {}]
  %s6 = sld [smem:[#allocation0]]
  $region53: #{ssim_forward.1} parent=0
    _
  %s8 = ssub.s32 1, %s6
  %s9 = scalar_select 0, %s8, %s6
  loop: start=0, step=1, limit=4
  $region2: #{ssim_forward.1} parent=0 // loop_pre_header
    _
  $region3: #{ssim_forward.1} parent=0 // loop_header
    %s11 = sphi 0, %s15
    %p12 = scmp.ge.s32.totalorder %s11, 4
    %s21 = sphi 0, %s23
    %s24 = sphi 0, %s21
    %s25 = sphi 0, %s24
    %s41 = sphi 0, %s25
    %s47 = sphi 0, %s49
    %s50 = sphi 0, %s47
    %s51 = sphi 0, %s50
    %s67 = sphi 0, %s51
    %s73 = sphi 0, %s75
    %s76 = sphi 0, %s73
    %s77 = sphi 0, %s76
    %s93 = sphi 0, %s77
    %s97 = sphi 0, %s97
    %s99 = sphi 0, %s97
    %s100 = sphi 0, %s99
    %s114 = sphi 0, %s100
    %s118 = sphi 0, %s118
    %s120 = sphi 0, %s118
    %s121 = sphi 0, %s120
    %s135 = sphi 0, %s121
    %s141 = sphi 0, %s143
    %s144 = sphi 0, %s141
    %s145 = sphi 0, %s144
    %s161 = sphi 0, %s145
  $region4: #{ssim_forward.1} parent=0 // loop_header_branch
    %14 = sbr.rel (%p12) target = $region8
  $region5: #{ssim_forward.1} parent=0 // loop_body
    %s16 = ssub.s32 %s11, 1
    %s17 = ssub.s32 %s11, 2
    %s18 = sadd.s32 %s11, 1
    %s19 = ssub.s32 %s11, %s18
    %p20 = scmp.eq.s32.totalorder %s19, 0
    %s22 = sadd.s32 %s21, 1
    %s23 = scalar_select %p20, %s21, %s22
    %p26 = pneg %p20
    %p27 = scmp.eq.s32.totalorder %s11, 1
    %p28 = por %p26, %p27
    %p29 = scmp.ne.s32.totalorder %s21, %s24
    %p30 = scmp.eq.s32.totalorder %s11, 0
    %p31 = por %p29, %p30
    %p32 = scmp.ne.s32.totalorder %s21, %s24
    %p33 = scmp.eq.s32.totalorder %s16, 1
    %p34 = por %p32, %p33
    %p35 = scmp.ne.s32.totalorder %s24, %s25
    %p36 = scmp.eq.s32.totalorder %s16, 0
    %p37 = por %p35, %p36
    %p38 = scmp.ne.s32.totalorder %s24, %s25
    %p39 = scmp.eq.s32.totalorder %s17, 1
    %p40 = por %p38, %p39
    %p42 = scmp.ne.s32.totalorder %s25, %s41
    %p43 = scmp.eq.s32.totalorder %s17, 0
    %p44 = por %p42, %p43
    %s45 = ssub.s32 %s11, %s18
    %p46 = scmp.eq.s32.totalorder %s45, 0
    %s48 = sadd.s32 %s47, 1
    %s49 = scalar_select %p46, %s47, %s48
    %p52 = pneg %p46
    %p53 = scmp.eq.s32.totalorder %s11, 1
    %p54 = por %p52, %p53
    %p55 = scmp.ne.s32.totalorder %s47, %s50
    %p56 = scmp.eq.s32.totalorder %s11, 0
    %p57 = por %p55, %p56
    %p58 = scmp.ne.s32.totalorder %s47, %s50
    %p59 = scmp.eq.s32.totalorder %s16, 1
    %p60 = por %p58, %p59
    %p61 = scmp.ne.s32.totalorder %s50, %s51
    %p62 = scmp.eq.s32.totalorder %s16, 0
    %p63 = por %p61, %p62
    %p64 = scmp.ne.s32.totalorder %s50, %s51
    %p65 = scmp.eq.s32.totalorder %s17, 1
    %p66 = por %p64, %p65
    %p68 = scmp.ne.s32.totalorder %s51, %s67
    %p69 = scmp.eq.s32.totalorder %s17, 0
    %p70 = por %p68, %p69
    %s71 = ssub.s32 %s11, %s18
    %p72 = scmp.eq.s32.totalorder %s71, 0
    %s74 = sadd.s32 %s73, 1
    %s75 = scalar_select %p72, %s73, %s74
    %p78 = pneg %p72
    %p79 = scmp.eq.s32.totalorder %s11, 1
    %p80 = por %p78, %p79
    %p81 = scmp.ne.s32.totalorder %s73, %s76
    %p82 = scmp.eq.s32.totalorder %s11, 0
    %p83 = por %p81, %p82
    %p84 = scmp.ne.s32.totalorder %s73, %s76
    %p85 = scmp.eq.s32.totalorder %s16, 1
    %p86 = por %p84, %p85
    %p87 = scmp.ne.s32.totalorder %s76, %s77
    %p88 = scmp.eq.s32.totalorder %s16, 0
    %p89 = por %p87, %p88
    %p90 = scmp.ne.s32.totalorder %s76, %s77
    %p91 = scmp.eq.s32.totalorder %s17, 1
    %p92 = por %p90, %p91
    %p94 = scmp.ne.s32.totalorder %s77, %s93
    %p95 = scmp.eq.s32.totalorder %s17, 0
    %p96 = por %p94, %p95
    %s98 = sadd.s32 %s97, 1
    %p101 = scmp.eq.s32.totalorder %s11, 1
    %p102 = scmp.ne.s32.totalorder %s97, %s99
    %p103 = scmp.eq.s32.totalorder %s11, 0
    %p104 = por %p102, %p103
    %p105 = scmp.ne.s32.totalorder %s97, %s99
    %p106 = scmp.eq.s32.totalorder %s16, 1
    %p107 = por %p105, %p106
    %p108 = scmp.ne.s32.totalorder %s99, %s100
    %p109 = scmp.eq.s32.totalorder %s16, 0
    %p110 = por %p108, %p109
    %p111 = scmp.ne.s32.totalorder %s99, %s100
    %p112 = scmp.eq.s32.totalorder %s17, 1
    %p113 = por %p111, %p112
    %p115 = scmp.ne.s32.totalorder %s100, %s114
    %p116 = scmp.eq.s32.totalorder %s17, 0
    %p117 = por %p115, %p116
    %s119 = sadd.s32 %s118, 1
    %p122 = scmp.eq.s32.totalorder %s11, 1
    %p123 = scmp.ne.s32.totalorder %s118, %s120
    %p124 = scmp.eq.s32.totalorder %s11, 0
    %p125 = por %p123, %p124
    %p126 = scmp.ne.s32.totalorder %s118, %s120
    %p127 = scmp.eq.s32.totalorder %s16, 1
    %p128 = por %p126, %p127
    %p129 = scmp.ne.s32.totalorder %s120, %s121
    %p130 = scmp.eq.s32.totalorder %s16, 0
    %p131 = por %p129, %p130
    %p132 = scmp.ne.s32.totalorder %s120, %s121
    %p133 = scmp.eq.s32.totalorder %s17, 1
    %p134 = por %p132, %p133
    %p136 = scmp.ne.s32.totalorder %s121, %s135
    %p137 = scmp.eq.s32.totalorder %s17, 0
    %p138 = por %p136, %p137
    %s139 = ssub.s32 %s11, %s18
    %p140 = scmp.eq.s32.totalorder %s139, 0
    %s142 = sadd.s32 %s141, 1
    %s143 = scalar_select %p140, %s141, %s142
    %p146 = pneg %p140
    %p147 = scmp.eq.s32.totalorder %s11, 1
    %p148 = por %p146, %p147
    %p149 = scmp.ne.s32.totalorder %s141, %s144
    %p150 = scmp.eq.s32.totalorder %s11, 0
    %p151 = por %p149, %p150
    %p152 = scmp.ne.s32.totalorder %s141, %s144
    %p153 = scmp.eq.s32.totalorder %s16, 1
    %p154 = por %p152, %p153
    %p155 = scmp.ne.s32.totalorder %s144, %s145
    %p156 = scmp.eq.s32.totalorder %s16, 0
    %p157 = por %p155, %p156
    %p158 = scmp.ne.s32.totalorder %s144, %s145
    %p159 = scmp.eq.s32.totalorder %s17, 1
    %p160 = por %p158, %p159
    %p162 = scmp.ne.s32.totalorder %s145, %s161
    %p163 = scmp.eq.s32.totalorder %s17, 0
    %p164 = por %p162, %p163
    %p165 = scmp.le.s32.totalorder 1, %s11
    %p166 = scmp.lt.s32.totalorder %s11, 3
    %p167 = pnand %p165, %p166
    %p168 = pneg %p167
    // Predicated region
    $region9: #{ssim_forward.1} parent=5 // pred_check
      _
    $region10: #{ssim_forward.1} parent=5 // pred_check_branch
      %170 = sbr.rel (%p167) target = $region12
    $region11: #{ssim_forward.1} parent=5 // pred_region
      %s171 = ssub.s32 %s11, 1
      // Predicated region
      $region13: #{ssim_forward.1} parent=11 // pred_check
        %p172 = pneg %p110
      $region14: #{ssim_forward.1} parent=11 // pred_check_branch
        %174 = sbr.rel (%p172) target = $region16
      $region15: #{ssim_forward.1} parent=11 // pred_region
        _
      $region16: #{ssim_forward.1} parent=11 // pred_fallthru
        _
      // Predicated region
      $region17: #{ssim_forward.1} parent=11 // pred_check
        %p175 = pneg %p131
      $region18: #{ssim_forward.1} parent=11 // pred_check_branch
        %177 = sbr.rel (%p175) target = $region20
      $region19: #{ssim_forward.1} parent=11 // pred_region
        _
      $region20: #{ssim_forward.1} parent=11 // pred_fallthru
        _
    $region12: #{ssim_forward.1} parent=5 // pred_fallthru
      _
    %p178 = scmp.lt.s32.totalorder %s11, 2
    // Predicated region
    $region21: #{ssim_forward.1} parent=5 // pred_check
      %p179 = pneg %p178
    $region22: #{ssim_forward.1} parent=5 // pred_check_branch
      %181 = sbr.rel (%p179) target = $region24
    $region23: #{ssim_forward.1} parent=5 // pred_region
      // Predicated region
      $region25: #{ssim_forward.1} parent=23 // pred_check
        %p182 = pneg %p31
      $region26: #{ssim_forward.1} parent=23 // pred_check_branch
        %184 = sbr.rel (%p182) target = $region28
      $region27: #{ssim_forward.1} parent=23 // pred_region
        %p185 = scmp.lt.s32.totalorder %s11, 1
        %s186 = scalar_select %p185, %s11, 1
        %s187 = smul.addr %s186, 2
        %s188 = smul.addr %s187, 8
        %s189 = scalar_lea.vmem %s0, %s188
      $region28: #{ssim_forward.1} parent=23 // pred_fallthru
        _
      // Predicated region
      $region29: #{ssim_forward.1} parent=23 // pred_check
        %p190 = pneg %p57
      $region30: #{ssim_forward.1} parent=23 // pred_check_branch
        %192 = sbr.rel (%p190) target = $region32
      $region31: #{ssim_forward.1} parent=23 // pred_region
        %p193 = scmp.lt.s32.totalorder %s11, 1
        %s194 = scalar_select %p193, %s11, 1
        %s195 = smul.addr %s194, 2
        %s196 = smul.addr %s195, 8
        %s197 = scalar_lea.vmem %s1, %s196
      $region32: #{ssim_forward.1} parent=23 // pred_fallthru
        _
      // Predicated region
      $region33: #{ssim_forward.1} parent=23 // pred_check
        %p198 = pneg %p83
      $region34: #{ssim_forward.1} parent=23 // pred_check_branch
        %200 = sbr.rel (%p198) target = $region36
      $region35: #{ssim_forward.1} parent=23 // pred_region
        %p201 = scmp.lt.s32.totalorder %s11, 1
        %s202 = scalar_select %p201, %s11, 1
        %s203 = smul.addr %s202, 4
        %s204 = smul.addr %s203, 8
        %s205 = scalar_lea.vmem %s2, %s204
      $region36: #{ssim_forward.1} parent=23 // pred_fallthru
        _
    $region24: #{ssim_forward.1} parent=5 // pred_fallthru
      _
    %p206 = scmp.le.s32.totalorder 1, %s11
    %p207 = scmp.lt.s32.totalorder %s11, 3
    %p208 = pnand %p206, %p207
    %p209 = pneg %p208
    // Predicated region
    $region37: #{ssim_forward.1} parent=5 // pred_check
      _
    $region38: #{ssim_forward.1} parent=5 // pred_check_branch
      %211 = sbr.rel (%p208) target = $region40
    $region39: #{ssim_forward.1} parent=5 // pred_region
      %s212 = ssub.s32 %s11, 1
      %p213 = scmp.lt.s32.totalorder %s16, 1
      %s214 = scalar_select %p213, %s16, 1
      %s215 = smul.addr %s214, 2
      %s216 = smul.addr %s215, 8
      %s217 = scalar_lea.vmem %s0, %s216
      %p218 = pneg %p37
      %p219 = pneg %p34
      %p220 = scmp.lt.s32.totalorder %s16, 1
      %s221 = scalar_select %p220, %s16, 1
      %s222 = smul.addr %s221, 2
      %s223 = smul.addr %s222, 8
      %s224 = scalar_lea.vmem %s1, %s223
      %p225 = pneg %p63
      %p226 = pneg %p60
      %p227 = scmp.lt.s32.totalorder %s16, 1
      %s228 = scalar_select %p227, %s16, 1
      %s229 = smul.addr %s228, 4
      %s230 = smul.addr %s229, 8
      %s231 = scalar_lea.vmem %s2, %s230
      %p232 = pneg %p89
      %p233 = pneg %p86
      %p234 = pneg %p110
      %p235 = pneg %p107
      %p236 = pneg %p131
      %p237 = pneg %p128
      %p238 = pneg %p157
      %p239 = pneg %p154
      %p240 = scmp.lt.s32.totalorder %s16, 1
      %s241 = scalar_select %p240, %s16, 1
      %s242 = scalar_lea.vmem %s5, %s241
      %p243 = scmp.lt.s32.totalorder %s16, 1
      %s244 = scalar_select %p243, %s16, 1
      %s245 = smul.addr %s244, 2
      %s246 = smul.addr %s245, 8
      %s247 = scalar_lea.vmem %s0, %s246
      %p248 = scmp.lt.s32.totalorder %s16, 1
      %s249 = scalar_select %p248, %s16, 1
      %s250 = smul.addr %s249, 2
      %s251 = smul.addr %s250, 8
      %s252 = scalar_lea.vmem %s1, %s251
      %p253 = scmp.lt.s32.totalorder %s16, 1
      %s254 = scalar_select %p253, %s16, 1
      %s255 = smul.addr %s254, 4
      %s256 = smul.addr %s255, 8
      %s257 = scalar_lea.vmem %s2, %s256
      %p258 = scmp.lt.s32.totalorder %s16, 1
      %s259 = scalar_select %p258, %s16, 1
      %s260 = scalar_lea.vmem %s5, %s259
      %v261 = vld [vmem:[%s247] sm:$0xff]
      %v262 = vld [vmem:[%s247 + $0x8] sm:$0xff]
      %v263 = vld [vmem:[%s252] sm:$0xff]
      %v264 = vld [vmem:[%s252 + $0x8] sm:$0xff]
      %v265 = vld [vmem:[%s257] sm:$0xff]
      %v266 = vld [vmem:[%s257 + $0x8] sm:$0xff]
      %v267 = vld [vmem:[%s257 + $0x10] sm:$0xff]
      %v268 = vld [vmem:[%s257 + $0x18] sm:$0xff]
      %v269 = vld [vmem:[%s3] sm:$0xff]
      %v270 = vld [vmem:[%s3 + $0x8] sm:$0xff]
      %v271 = vld [vmem:[%s3 + $0x10] sm:$0xff]
      %v272 = vld [vmem:[%s3 + $0x18] sm:$0xff]
      %v273 = vld [vmem:[%s3 + $0x20] sm:$0xff]
      %v274 = vld [vmem:[%s3 + $0x28] sm:$0xff]
      %v275 = vld [vmem:[%s3 + $0x30] sm:$0xff]
      %v276 = vld [vmem:[%s3 + $0x38] sm:$0xff]
      %v277 = vld [vmem:[%s3 + $0x40] sm:$0xff]
      %v278 = vld [vmem:[%s3 + $0x48] sm:$0xff]
      %v279 = vld [vmem:[%s3 + $0x50] sm:$0xff]
      %v280 = vld [vmem:[%s3 + $0x58] sm:$0xff]
      %v281 = vld [vmem:[%s3 + $0x60] sm:$0xff]
      %v282 = vld [vmem:[%s3 + $0x68] sm:$0xff]
      %v283 = vld [vmem:[%s3 + $0x70] sm:$0xff]
      %v284 = vld [vmem:[%s3 + $0x78] sm:$0xff]
      %v285 = vld [vmem:[%s4] sm:$0xff]
      %v286 = vld [vmem:[%s4 + $0x8] sm:$0xff]
      %287 = vmatpush.msra.mxu0 %v284
      %288 = vmatpush.msra.mxu0 %v283
      %289 = vmatpush.msra.mxu0 %v282
      %290 = vmatpush.msra.mxu0 %v281
      %291 = vmatpush.msra.mxu0 %v280
      %292 = vmatpush.msra.mxu0 %v279
      %293 = vmatpush.msra.mxu0 %v278
      %294 = vmatpush.msra.mxu0 %v277
      %295 = vmatpush.msra.mxu0 %v276
      %296 = vmatpush.msra.mxu0 %v275
      %297 = vmatpush.msra.mxu0 %v274
      %298 = vmatpush.msra.mxu0 %v273
      %299 = vmatpush.msra.mxu0 %v272
      %300 = vmatpush.msra.mxu0 %v271
      %301 = vmatpush.msra.mxu0 %v270
      %302 = vmatpush.msra.mxu0 %v269
      %303 = vmatmul.f32.gmra.mxu0 %v261
      %v304 = vpop.f32.mrf.mxu0
      %v305 = vadd.f32 0.0, %v304
      %306 = vmatmul.f32.gmra.mxu0 %v262
      %v307 = vpop.f32.mrf.mxu0
      %v308 = vadd.f32 0.0, %v307
      %309 = vmatmul.f32.gmra.mxu0 %v263
      %v310 = vpop.f32.mrf.mxu0
      %v311 = vadd.f32 0.0, %v310
      %312 = vmatmul.f32.gmra.mxu0 %v264
      %v313 = vpop.f32.mrf.mxu0
      %v314 = vadd.f32 0.0, %v313
      %315 = vdwg.mxu0
      %vm316 = vcmask 130048
      %v318 = vsel %vm316, %v285, 0
      %v321 = vsel %vm316, %v286, 0
      %323 = vmatpush.msra.mxu0 0.0
      %324 = vmatpush.msra.mxu0 0.0
      %325 = vmatpush.msra.mxu0 0.0
      %326 = vmatpush.msra.mxu0 0.0
      %327 = vmatpush.msra.mxu0 0.0
      %328 = vmatpush.msra.mxu0 0.0
      %329 = vmatpush.msra.mxu0 0.0
      %330 = vmatpush.msra.mxu0 0.0
      %331 = vmatpush.msra.mxu0 0.0
      %332 = vmatpush.msra.mxu0 0.0
      %333 = vmatpush.msra.mxu0 0.0
      %334 = vmatpush.msra.mxu0 0.0
      %335 = vmatpush.msra.mxu0 0.0
      %336 = vmatpush.msra.mxu0 0.0
      %337 = vmatpush.msra.mxu0 %v308
      %338 = vmatpush.msra.mxu0 %v305
      %339 = vmatmul.f32.gmra.mxu0 %v318
      %v340 = vpop.f32.mrf.mxu0
      %v341 = vadd.f32 0.0, %v340
      %342 = vmatmul.f32.gmra.mxu0 %v321
      %v343 = vpop.f32.mrf.mxu0
      %v344 = vadd.f32 0.0, %v343
      %345 = vdwg.mxu0
      %346 = vmatpush.msra.mxu0 0.0
      %347 = vmatpush.msra.mxu0 0.0
      %348 = vmatpush.msra.mxu0 0.0
      %349 = vmatpush.msra.mxu0 0.0
      %350 = vmatpush.msra.mxu0 0.0
      %351 = vmatpush.msra.mxu0 0.0
      %352 = vmatpush.msra.mxu0 0.0
      %353 = vmatpush.msra.mxu0 0.0
      %354 = vmatpush.msra.mxu0 0.0
      %355 = vmatpush.msra.mxu0 0.0
      %356 = vmatpush.msra.mxu0 0.0
      %357 = vmatpush.msra.mxu0 0.0
      %358 = vmatpush.msra.mxu0 0.0
      %359 = vmatpush.msra.mxu0 0.0
      %360 = vmatpush.msra.mxu0 %v314
      %361 = vmatpush.msra.mxu0 %v311
      %362 = vmatmul.f32.gmra.mxu0 %v318
      %v363 = vpop.f32.mrf.mxu0
      %v364 = vadd.f32 0.0, %v363
      %365 = vmatmul.f32.gmra.mxu0 %v321
      %v366 = vpop.f32.mrf.mxu0
      %v367 = vadd.f32 0.0, %v366
      %368 = vdwg.mxu0
      %369 = vmatpush.msra.mxu0 %v284
      %370 = vmatpush.msra.mxu0 %v283
      %371 = vmatpush.msra.mxu0 %v282
      %372 = vmatpush.msra.mxu0 %v281
      %373 = vmatpush.msra.mxu0 %v280
      %374 = vmatpush.msra.mxu0 %v279
      %375 = vmatpush.msra.mxu0 %v278
      %376 = vmatpush.msra.mxu0 %v277
      %377 = vmatpush.msra.mxu0 %v276
      %378 = vmatpush.msra.mxu0 %v275
      %379 = vmatpush.msra.mxu0 %v274
      %380 = vmatpush.msra.mxu0 %v273
      %381 = vmatpush.msra.mxu0 %v272
      %382 = vmatpush.msra.mxu0 %v271
      %383 = vmatpush.msra.mxu0 %v270
      %384 = vmatpush.msra.mxu0 %v269
      %385 = vmatmul.f32.gmra.mxu0 %v265
      %v386 = vpop.f32.mrf.mxu0
      %v387 = vadd.f32 0.0, %v386
      %388 = vmatmul.f32.gmra.mxu0 %v266
      %v389 = vpop.f32.mrf.mxu0
      %v390 = vadd.f32 0.0, %v389
      %391 = vmatmul.f32.gmra.mxu0 %v267
      %v392 = vpop.f32.mrf.mxu0
      %v393 = vadd.f32 0.0, %v392
      %394 = vmatmul.f32.gmra.mxu0 %v268
      %v395 = vpop.f32.mrf.mxu0
      %v396 = vadd.f32 0.0, %v395
      %397 = vdwg.mxu0
      %398 = vmatpush.msra.mxu0 0.0
      %399 = vmatpush.msra.mxu0 0.0
      %400 = vmatpush.msra.mxu0 0.0
      %401 = vmatpush.msra.mxu0 0.0
      %402 = vmatpush.msra.mxu0 0.0
      %403 = vmatpush.msra.mxu0 0.0
      %404 = vmatpush.msra.mxu0 0.0
      %405 = vmatpush.msra.mxu0 0.0
      %406 = vmatpush.msra.mxu0 0.0
      %407 = vmatpush.msra.mxu0 0.0
      %408 = vmatpush.msra.mxu0 0.0
      %409 = vmatpush.msra.mxu0 0.0
      %410 = vmatpush.msra.mxu0 0.0
      %411 = vmatpush.msra.mxu0 0.0
      %412 = vmatpush.msra.mxu0 %v390
      %413 = vmatpush.msra.mxu0 %v387
      %414 = vmatmul.f32.gmra.mxu0 %v318
      %v415 = vpop.f32.mrf.mxu0
      %v416 = vadd.f32 0.0, %v415
      %417 = vmatmul.f32.gmra.mxu0 %v321
      %v418 = vpop.f32.mrf.mxu0
      %v419 = vadd.f32 0.0, %v418
      %420 = vdwg.mxu0
      %421 = vmatpush.msra.mxu0 0.0
      %422 = vmatpush.msra.mxu0 0.0
      %423 = vmatpush.msra.mxu0 0.0
      %424 = vmatpush.msra.mxu0 0.0
      %425 = vmatpush.msra.mxu0 0.0
      %426 = vmatpush.msra.mxu0 0.0
      %427 = vmatpush.msra.mxu0 0.0
      %428 = vmatpush.msra.mxu0 0.0
      %429 = vmatpush.msra.mxu0 0.0
      %430 = vmatpush.msra.mxu0 0.0
      %431 = vmatpush.msra.mxu0 0.0
      %432 = vmatpush.msra.mxu0 0.0
      %433 = vmatpush.msra.mxu0 0.0
      %434 = vmatpush.msra.mxu0 0.0
      %435 = vmatpush.msra.mxu0 %v396
      %436 = vmatpush.msra.mxu0 %v393
      %437 = vmatmul.f32.gmra.mxu0 %v318
      %v438 = vpop.f32.mrf.mxu0
      %v439 = vadd.f32 0.0, %v438
      %440 = vmatmul.f32.gmra.mxu0 %v321
      %v441 = vpop.f32.mrf.mxu0
      %v442 = vadd.f32 0.0, %v441
      %443 = vdwg.mxu0
      %v444 = vmul.f32 %v261, %v261
      %v445 = vmul.f32 %v262, %v262
      %v446 = vmul.f32 %v263, %v263
      %v447 = vmul.f32 %v264, %v264
      %448 = vmatpush.msra.mxu0 %v284
      %449 = vmatpush.msra.mxu0 %v283
      %450 = vmatpush.msra.mxu0 %v282
      %451 = vmatpush.msra.mxu0 %v281
      %452 = vmatpush.msra.mxu0 %v280
      %453 = vmatpush.msra.mxu0 %v279
      %454 = vmatpush.msra.mxu0 %v278
      %455 = vmatpush.msra.mxu0 %v277
      %456 = vmatpush.msra.mxu0 %v276
      %457 = vmatpush.msra.mxu0 %v275
      %458 = vmatpush.msra.mxu0 %v274
      %459 = vmatpush.msra.mxu0 %v273
      %460 = vmatpush.msra.mxu0 %v272
      %461 = vmatpush.msra.mxu0 %v271
      %462 = vmatpush.msra.mxu0 %v270
      %463 = vmatpush.msra.mxu0 %v269
      %464 = vmatmul.f32.gmra.mxu0 %v444
      %v465 = vpop.f32.mrf.mxu0
      %v466 = vadd.f32 0.0, %v465
      %467 = vmatmul.f32.gmra.mxu0 %v445
      %v468 = vpop.f32.mrf.mxu0
      %v469 = vadd.f32 0.0, %v468
      %470 = vmatmul.f32.gmra.mxu0 %v446
      %v471 = vpop.f32.mrf.mxu0
      %v472 = vadd.f32 0.0, %v471
      %473 = vmatmul.f32.gmra.mxu0 %v447
      %v474 = vpop.f32.mrf.mxu0
      %v475 = vadd.f32 0.0, %v474
      %476 = vdwg.mxu0
      %477 = vmatpush.msra.mxu0 0.0
      %478 = vmatpush.msra.mxu0 0.0
      %479 = vmatpush.msra.mxu0 0.0
      %480 = vmatpush.msra.mxu0 0.0
      %481 = vmatpush.msra.mxu0 0.0
      %482 = vmatpush.msra.mxu0 0.0
      %483 = vmatpush.msra.mxu0 0.0
      %484 = vmatpush.msra.mxu0 0.0
      %485 = vmatpush.msra.mxu0 0.0
      %486 = vmatpush.msra.mxu0 0.0
      %487 = vmatpush.msra.mxu0 0.0
      %488 = vmatpush.msra.mxu0 0.0
      %489 = vmatpush.msra.mxu0 0.0
      %490 = vmatpush.msra.mxu0 0.0
      %491 = vmatpush.msra.mxu0 %v469
      %492 = vmatpush.msra.mxu0 %v466
      %493 = vmatmul.f32.gmra.mxu0 %v318
      %v494 = vpop.f32.mrf.mxu0
      %v495 = vadd.f32 0.0, %v494
      %496 = vmatmul.f32.gmra.mxu0 %v321
      %v497 = vpop.f32.mrf.mxu0
      %v498 = vadd.f32 0.0, %v497
      %499 = vdwg.mxu0
      %500 = vmatpush.msra.mxu0 0.0
      %501 = vmatpush.msra.mxu0 0.0
      %502 = vmatpush.msra.mxu0 0.0
      %503 = vmatpush.msra.mxu0 0.0
      %504 = vmatpush.msra.mxu0 0.0
      %505 = vmatpush.msra.mxu0 0.0
      %506 = vmatpush.msra.mxu0 0.0
      %507 = vmatpush.msra.mxu0 0.0
      %508 = vmatpush.msra.mxu0 0.0
      %509 = vmatpush.msra.mxu0 0.0
      %510 = vmatpush.msra.mxu0 0.0
      %511 = vmatpush.msra.mxu0 0.0
      %512 = vmatpush.msra.mxu0 0.0
      %513 = vmatpush.msra.mxu0 0.0
      %514 = vmatpush.msra.mxu0 %v475
      %515 = vmatpush.msra.mxu0 %v472
      %516 = vmatmul.f32.gmra.mxu0 %v318
      %v517 = vpop.f32.mrf.mxu0
      %v518 = vadd.f32 0.0, %v517
      %519 = vmatmul.f32.gmra.mxu0 %v321
      %v520 = vpop.f32.mrf.mxu0
      %v521 = vadd.f32 0.0, %v520
      %522 = vdwg.mxu0
      %v523 = vmul.f32 %v265, %v265
      %v524 = vmul.f32 %v266, %v266
      %v525 = vmul.f32 %v267, %v267
      %v526 = vmul.f32 %v268, %v268
      %527 = vmatpush.msra.mxu0 %v284
      %528 = vmatpush.msra.mxu0 %v283
      %529 = vmatpush.msra.mxu0 %v282
      %530 = vmatpush.msra.mxu0 %v281
      %531 = vmatpush.msra.mxu0 %v280
      %532 = vmatpush.msra.mxu0 %v279
      %533 = vmatpush.msra.mxu0 %v278
      %534 = vmatpush.msra.mxu0 %v277
      %535 = vmatpush.msra.mxu0 %v276
      %536 = vmatpush.msra.mxu0 %v275
      %537 = vmatpush.msra.mxu0 %v274
      %538 = vmatpush.msra.mxu0 %v273
      %539 = vmatpush.msra.mxu0 %v272
      %540 = vmatpush.msra.mxu0 %v271
      %541 = vmatpush.msra.mxu0 %v270
      %542 = vmatpush.msra.mxu0 %v269
      %543 = vmatmul.f32.gmra.mxu0 %v523
      %v544 = vpop.f32.mrf.mxu0
      %v545 = vadd.f32 0.0, %v544
      %546 = vmatmul.f32.gmra.mxu0 %v524
      %v547 = vpop.f32.mrf.mxu0
      %v548 = vadd.f32 0.0, %v547
      %549 = vmatmul.f32.gmra.mxu0 %v525
      %v550 = vpop.f32.mrf.mxu0
      %v551 = vadd.f32 0.0, %v550
      %552 = vmatmul.f32.gmra.mxu0 %v526
      %v553 = vpop.f32.mrf.mxu0
      %v554 = vadd.f32 0.0, %v553
      %555 = vdwg.mxu0
      %556 = vmatpush.msra.mxu0 0.0
      %557 = vmatpush.msra.mxu0 0.0
      %558 = vmatpush.msra.mxu0 0.0
      %559 = vmatpush.msra.mxu0 0.0
      %560 = vmatpush.msra.mxu0 0.0
      %561 = vmatpush.msra.mxu0 0.0
      %562 = vmatpush.msra.mxu0 0.0
      %563 = vmatpush.msra.mxu0 0.0
      %564 = vmatpush.msra.mxu0 0.0
      %565 = vmatpush.msra.mxu0 0.0
      %566 = vmatpush.msra.mxu0 0.0
      %567 = vmatpush.msra.mxu0 0.0
      %568 = vmatpush.msra.mxu0 0.0
      %569 = vmatpush.msra.mxu0 0.0
      %570 = vmatpush.msra.mxu0 %v548
      %571 = vmatpush.msra.mxu0 %v545
      %572 = vmatmul.f32.gmra.mxu0 %v318
      %v573 = vpop.f32.mrf.mxu0
      %v574 = vadd.f32 0.0, %v573
      %575 = vmatmul.f32.gmra.mxu0 %v321
      %v576 = vpop.f32.mrf.mxu0
      %v577 = vadd.f32 0.0, %v576
      %578 = vdwg.mxu0
      %579 = vmatpush.msra.mxu0 0.0
      %580 = vmatpush.msra.mxu0 0.0
      %581 = vmatpush.msra.mxu0 0.0
      %582 = vmatpush.msra.mxu0 0.0
      %583 = vmatpush.msra.mxu0 0.0
      %584 = vmatpush.msra.mxu0 0.0
      %585 = vmatpush.msra.mxu0 0.0
      %586 = vmatpush.msra.mxu0 0.0
      %587 = vmatpush.msra.mxu0 0.0
      %588 = vmatpush.msra.mxu0 0.0
      %589 = vmatpush.msra.mxu0 0.0
      %590 = vmatpush.msra.mxu0 0.0
      %591 = vmatpush.msra.mxu0 0.0
      %592 = vmatpush.msra.mxu0 0.0
      %593 = vmatpush.msra.mxu0 %v554
      %594 = vmatpush.msra.mxu0 %v551
      %595 = vmatmul.f32.gmra.mxu0 %v318
      %v596 = vpop.f32.mrf.mxu0
      %v597 = vadd.f32 0.0, %v596
      %598 = vmatmul.f32.gmra.mxu0 %v321
      %v599 = vpop.f32.mrf.mxu0
      %v600 = vadd.f32 0.0, %v599
      %601 = vdwg.mxu0
      %v602 = vmul.f32 %v261, %v265
      %v603 = vmul.f32 %v262, %v266
      %v604 = vmul.f32 %v263, %v267
      %v605 = vmul.f32 %v264, %v268
      %606 = vmatpush.msra.mxu0 %v284
      %607 = vmatpush.msra.mxu0 %v283
      %608 = vmatpush.msra.mxu0 %v282
      %609 = vmatpush.msra.mxu0 %v281
      %610 = vmatpush.msra.mxu0 %v280
      %611 = vmatpush.msra.mxu0 %v279
      %612 = vmatpush.msra.mxu0 %v278
      %613 = vmatpush.msra.mxu0 %v277
      %614 = vmatpush.msra.mxu0 %v276
      %615 = vmatpush.msra.mxu0 %v275
      %616 = vmatpush.msra.mxu0 %v274
      %617 = vmatpush.msra.mxu0 %v273
      %618 = vmatpush.msra.mxu0 %v272
      %619 = vmatpush.msra.mxu0 %v271
      %620 = vmatpush.msra.mxu0 %v270
      %621 = vmatpush.msra.mxu0 %v269
      %622 = vmatmul.f32.gmra.mxu0 %v602
      %v623 = vpop.f32.mrf.mxu0
      %v624 = vadd.f32 0.0, %v623
      %625 = vmatmul.f32.gmra.mxu0 %v603
      %v626 = vpop.f32.mrf.mxu0
      %v627 = vadd.f32 0.0, %v626
      %628 = vmatmul.f32.gmra.mxu0 %v604
      %v629 = vpop.f32.mrf.mxu0
      %v630 = vadd.f32 0.0, %v629
      %631 = vmatmul.f32.gmra.mxu0 %v605
      %v632 = vpop.f32.mrf.mxu0
      %v633 = vadd.f32 0.0, %v632
      %634 = vdwg.mxu0
      %635 = vmatpush.msra.mxu0 0.0
      %636 = vmatpush.msra.mxu0 0.0
      %637 = vmatpush.msra.mxu0 0.0
      %638 = vmatpush.msra.mxu0 0.0
      %639 = vmatpush.msra.mxu0 0.0
      %640 = vmatpush.msra.mxu0 0.0
      %641 = vmatpush.msra.mxu0 0.0
      %642 = vmatpush.msra.mxu0 0.0
      %643 = vmatpush.msra.mxu0 0.0
      %644 = vmatpush.msra.mxu0 0.0
      %645 = vmatpush.msra.mxu0 0.0
      %646 = vmatpush.msra.mxu0 0.0
      %647 = vmatpush.msra.mxu0 0.0
      %648 = vmatpush.msra.mxu0 0.0
      %649 = vmatpush.msra.mxu0 %v627
      %650 = vmatpush.msra.mxu0 %v624
      %651 = vmatmul.f32.gmra.mxu0 %v318
      %v652 = vpop.f32.mrf.mxu0
      %v653 = vadd.f32 0.0, %v652
      %654 = vmatmul.f32.gmra.mxu0 %v321
      %v655 = vpop.f32.mrf.mxu0
      %v656 = vadd.f32 0.0, %v655
      %657 = vdwg.mxu0
      %658 = vmatpush.msra.mxu0 0.0
      %659 = vmatpush.msra.mxu0 0.0
      %660 = vmatpush.msra.mxu0 0.0
      %661 = vmatpush.msra.mxu0 0.0
      %662 = vmatpush.msra.mxu0 0.0
      %663 = vmatpush.msra.mxu0 0.0
      %664 = vmatpush.msra.mxu0 0.0
      %665 = vmatpush.msra.mxu0 0.0
      %666 = vmatpush.msra.mxu0 0.0
      %667 = vmatpush.msra.mxu0 0.0
      %668 = vmatpush.msra.mxu0 0.0
      %669 = vmatpush.msra.mxu0 0.0
      %670 = vmatpush.msra.mxu0 0.0
      %671 = vmatpush.msra.mxu0 0.0
      %672 = vmatpush.msra.mxu0 %v633
      %673 = vmatpush.msra.mxu0 %v630
      %674 = vmatmul.f32.gmra.mxu0 %v318
      %v675 = vpop.f32.mrf.mxu0
      %v676 = vadd.f32 0.0, %v675
      %677 = vmatmul.f32.gmra.mxu0 %v321
      %v678 = vpop.f32.mrf.mxu0
      %v679 = vadd.f32 0.0, %v678
      %680 = vdwg.mxu0
      %v681 = vmul.f32 %v341, %v341
      %v682 = vmul.f32 %v364, %v364
      %v683 = vmul.f32 %v344, %v344
      %v684 = vmul.f32 %v367, %v367
      %v685 = vmul.f32 %v416, %v416
      %v686 = vmul.f32 %v439, %v439
      %v687 = vmul.f32 %v419, %v419
      %v688 = vmul.f32 %v442, %v442
      %v689 = vmul.f32 %v341, %v416
      %v690 = vmul.f32 %v364, %v439
      %v691 = vmul.f32 %v344, %v419
      %v692 = vmul.f32 %v367, %v442
      %v693 = vsub.f32 %v495, %v681
      %v694 = vsub.f32 %v518, %v682
      %v695 = vsub.f32 %v498, %v683
      %v696 = vsub.f32 %v521, %v684
      %v697 = vsub.f32 %v574, %v685
      %v698 = vsub.f32 %v597, %v686
      %v699 = vsub.f32 %v577, %v687
      %v700 = vsub.f32 %v600, %v688
      %v701 = vsub.f32 %v653, %v689
      %v702 = vsub.f32 %v676, %v690
      %v703 = vsub.f32 %v656, %v691
      %v704 = vsub.f32 %v679, %v692
      %v705 = vmul.f32 %v689, 2.0
      %v706 = vmul.f32 %v690, 2.0
      %v707 = vmul.f32 %v691, 2.0
      %v708 = vmul.f32 %v692, 2.0
      %v709 = vadd.f32 %v705, 0.0001
      %v710 = vadd.f32 %v706, 0.0001
      %v711 = vadd.f32 %v707, 0.0001
      %v712 = vadd.f32 %v708, 0.0001
      %v713 = vmul.f32 %v701, 2.0
      %v714 = vmul.f32 %v702, 2.0
      %v715 = vmul.f32 %v703, 2.0
      %v716 = vmul.f32 %v704, 2.0
      %v717 = vadd.f32 %v713, 0.0009
      %v718 = vadd.f32 %v714, 0.0009
      %v719 = vadd.f32 %v715, 0.0009
      %v720 = vadd.f32 %v716, 0.0009
      %v721 = vmul.f32 %v709, %v717
      %v722 = vmul.f32 %v710, %v718
      %v723 = vmul.f32 %v711, %v719
      %v724 = vmul.f32 %v712, %v720
      %v725 = vadd.f32 %v681, %v685
      %v726 = vadd.f32 %v682, %v686
      %v727 = vadd.f32 %v683, %v687
      %v728 = vadd.f32 %v684, %v688
      %v729 = vadd.f32 %v725, 0.0001
      %v730 = vadd.f32 %v726, 0.0001
      %v731 = vadd.f32 %v727, 0.0001
      %v732 = vadd.f32 %v728, 0.0001
      %v733 = vadd.f32 %v693, %v697
      %v734 = vadd.f32 %v694, %v698
      %v735 = vadd.f32 %v695, %v699
      %v736 = vadd.f32 %v696, %v700
      %v737 = vadd.f32 %v733, 0.0009
      %v738 = vadd.f32 %v734, 0.0009
      %v739 = vadd.f32 %v735, 0.0009
      %v740 = vadd.f32 %v736, 0.0009
      %v741 = vmul.f32 %v729, %v737
      %v742 = vmul.f32 %v730, %v738
      %v743 = vmul.f32 %v731, %v739
      %v744 = vmul.f32 %v732, %v740
      %v745 = vrcp.pop %v741
      %v746 = vrcp.pop %v742
      %v747 = vrcp.pop %v743
      %v748 = vrcp.pop %v744
      %v749 = vmul.f32 %v721, %v745
      %v750 = vmul.f32 %v722, %v746
      %v751 = vmul.f32 %v723, %v747
      %v752 = vmul.f32 %v724, %v748
      %v753 = vlaneseq
      %v754 = vshrl.u32 %v753, 7
      %v755 = vadd.s32 %v754, 8
      %vm756 = vcmp.lt.s32.totalorder %v754, 16
      %vm757 = vcmp.lt.s32.totalorder %v755, 16
      %v758 = vlaneseq
      %v759 = vand.u32 %v758, 127
      %vm760 = vcmp.lt.s32.totalorder %v759, 16
      %vm761 = vmand %vm756, %vm760
      %vm762 = vmand %vm757, %vm760
      %v763 = vsel %vm761, %v749, 0.0
      %v764 = vsel %vm761, %v750, 0.0
      %v765 = vsel %vm762, %v751, 0.0
      %v766 = vsel %vm762, %v752, 0.0
      %v767 = vadd.f32 %v763, %v765
      %v768 = vrot.slane %v767, 4
      %v769 = vadd.f32 %v767, %v768
      %v770 = vrot.slane %v769, 2
      %v771 = vadd.f32 %v769, %v770
      %v772 = vrot.slane %v771, 1
      %v773 = vadd.f32 %v771, %v772
      %v774 = vadd.f32 %v764, %v766
      %v775 = vrot.slane %v774, 4
      %v776 = vadd.f32 %v774, %v775
      %v777 = vrot.slane %v776, 2
      %v778 = vadd.f32 %v776, %v777
      %v779 = vrot.slane %v778, 1
      %v780 = vadd.f32 %v778, %v779
      %v783 = vrot.slane %v780, 7
      %vm784 = vcmask 1040384
      %v785 = vsel %vm784, %v773, %v783
      %vm787 = vcmask 1041408
      %v788 = vsel %vm787, %v785, 0.0
      %789 = vadd.xlane.f32.xlu0 %v788
      %v790 = vpop.xlane.xlu0 %789
      %v792 = vperm.slane %v790, %v759
      %vm794 = vcmask 8192
      %795 = vst.msk [vmem:[%s260] sm:$0x1] %vm794, %v792
      %p796 = scmp.lt.s32.totalorder %s16, 1
      %s797 = scalar_select %p796, %s16, 1
      %s798 = scalar_lea.vmem %s5, %s797
      // Predicated region
      $region41: #{ssim_forward.1} parent=39 // pred_check
        %p799 = pneg %p154
      $region42: #{ssim_forward.1} parent=39 // pred_check_branch
        %801 = sbr.rel (%p799) target = $region44
      $region43: #{ssim_forward.1} parent=39 // pred_region
        _
      $region44: #{ssim_forward.1} parent=39 // pred_fallthru
        _
    $region40: #{ssim_forward.1} parent=5 // pred_fallthru
      _
    %p802 = scmp.le.s32.totalorder 2, %s11
    // Predicated region
    $region45: #{ssim_forward.1} parent=5 // pred_check
      %p803 = pneg %p802
    $region46: #{ssim_forward.1} parent=5 // pred_check_branch
      %805 = sbr.rel (%p803) target = $region48
    $region47: #{ssim_forward.1} parent=5 // pred_region
      %s806 = ssub.s32 %s11, 2
      // Predicated region
      $region49: #{ssim_forward.1} parent=47 // pred_check
        %p807 = pneg %p160
      $region50: #{ssim_forward.1} parent=47 // pred_check_branch
        %809 = sbr.rel (%p807) target = $region52
      $region51: #{ssim_forward.1} parent=47 // pred_region
        %p810 = scmp.lt.s32.totalorder %s17, 1
        %s811 = scalar_select %p810, %s17, 1
        %s812 = scalar_lea.vmem %s5, %s811
      $region52: #{ssim_forward.1} parent=47 // pred_fallthru
        _
    $region48: #{ssim_forward.1} parent=5 // pred_fallthru
      _
  $region6: #{ssim_forward.1} parent=0 // loop_footer
    %s15 = sadd.s32 1, %s11
  $region7: #{ssim_forward.1} parent=0 // loop_footer_branch
    %10 = sbr.rel target = $region3
  $region8: #{ssim_forward.1} parent=0 // loop_exit
    _

</llo_original>
